<compile_context>
chip_gen: v7x
topology: tpu7x:2x2x1
jax: 0.10.0
libtpu: 0.0.40
codegen_flags: <defaults>
</compile_context>

<pallas_src>
import math

import numpy as np

import jax
import jax.numpy as jnp
from jax.experimental import pallas as pl
from jax.experimental.pallas import tpu as pltpu

# ---------------- module hyper-parameters (small, consistent with forward) ----
BSZ = 2
N = 8                 # number of "memory" tokens in x
IN_DIM = 32
QUERY_DIM = 32
DIM = 32              # q/k projection dim
VALUE_DIM = 32
NHEADS = 4
HEAD_DIM = DIM // NHEADS
V_HEAD_DIM = VALUE_DIM // NHEADS
FFN_DIM = 128

SQRT = True
RESIDUAL = True
NORM_BEFORE = True

LN_EPS = 1e-5

# ---- weight/constant slab lane layout: (32 rows, 512 lanes), float32 ---------
_WSLAB_LANES = 512
_OFF_WQKV = 0                                  # [:, 0:96]   = wq*scale || wk || wv
_OFF_WR1 = 128                                 # [:, 128:256] = wr1
_OFF_WF = 256                                  # [:, 256:288] = wf
_OFF_HSUM = 288                                # [:, 288:292] = head_sum (32, NHEADS)
_OFF_HEXP = 384                                # [0:4, 384:416] = head_expand (NHEADS, 32)

# ---- row layout of the packed (9,128) parameter-vector table -----------------
(_ROW_BQ, _ROW_BKV, _ROW_BF, _ROW_G1, _ROW_BE1,
 _ROW_G2, _ROW_BE2, _ROW_BR1, _ROW_BR2) = range(9)
_VEC_ROWS = 9
_VEC_LANES = 128


def _layer_norm(v, gamma, beta):
    mu = jnp.mean(v, axis=-1, keepdims=True)
    var = jnp.mean((v - mu) ** 2, axis=-1, keepdims=True)
    return (v - mu) * jax.lax.rsqrt(var + LN_EPS) * gamma + beta


def self_attention_kernel(q_ref, x_ref, wslab_ref, wr2_ref, vec_ref,
                          o_ref, stack_ref):
    B = q_ref.shape[0]
    rows = x_ref.shape[0]
    n = rows // B

    query = q_ref[...]                       # (B, QUERY_DIM)
    xx = x_ref[...]                          # (B*n, IN_DIM)

    # Unpack the vector table (static row / lane slices).
    bq = vec_ref[_ROW_BQ:_ROW_BQ + 1, 0:DIM]                  # already *1/sqrt(hd)
    bkv = vec_ref[_ROW_BKV:_ROW_BKV + 1, 0:DIM + VALUE_DIM]
    bf = vec_ref[_ROW_BF:_ROW_BF + 1, 0:QUERY_DIM]
    g1 = vec_ref[_ROW_G1:_ROW_G1 + 1, 0:QUERY_DIM]
    be1 = vec_ref[_ROW_BE1:_ROW_BE1 + 1, 0:QUERY_DIM]
    g2 = vec_ref[_ROW_G2:_ROW_G2 + 1, 0:QUERY_DIM]
    be2 = vec_ref[_ROW_BE2:_ROW_BE2 + 1, 0:QUERY_DIM]
    br1 = vec_ref[_ROW_BR1:_ROW_BR1 + 1, 0:FFN_DIM]
    br2 = vec_ref[_ROW_BR2:_ROW_BR2 + 1, 0:QUERY_DIM]

    res = query
    qn = _layer_norm(query, g1, be1) if NORM_BEFORE else query

    # ---- single fused MXU push for the q and K/V projections -----------------
    # Stack the (normed) query rows on top of the x rows in a VMEM scratch and
    # matmul once against the fused weight [wq*scale | wk | wv]; irrelevant
    # cross-blocks of the result are simply not read.
    stack_ref[0:B, :] = qn
    stack_ref[B:B + rows, :] = xx
    wqkv = wslab_ref[:, _OFF_WQKV:_OFF_WQKV + DIM + DIM + VALUE_DIM]   # (32, 96)
    proj = jnp.dot(stack_ref[...], wqkv,
                   preferred_element_type=jnp.float32)                # (B+B*n, 96)

    q = proj[0:B, 0:DIM] + bq                                         # (B, DIM)
    kv = proj[B:B + rows, DIM:DIM + DIM + VALUE_DIM] + bkv            # (B*n, 64)
    k3 = kv[:, 0:DIM].reshape(B, n, DIM)                              # (B, n, DIM)
    v3 = kv[:, DIM:DIM + VALUE_DIM].reshape(B, n, VALUE_DIM)          # (B, n, VDIM)

    # Precomputed 0/1 head selectors from the slab (no in-kernel iota/compare).
    head_sum = wslab_ref[:, _OFF_HSUM:_OFF_HSUM + NHEADS]             # (DIM, H)
    head_expand = wslab_ref[0:NHEADS, _OFF_HEXP:_OFF_HEXP + VALUE_DIM]  # (H, VDIM)

    # Per-head logits: elementwise q*k then block-diagonal "head sum" matmul.
    prod = q[:, None, :] * k3                                         # (B, n, DIM)
    logits = jnp.dot(prod.reshape(B * n, DIM), head_sum,
                     preferred_element_type=jnp.float32).reshape(B, n, NHEADS)

    # Softmax over the key axis (n) for every (batch, head).
    m = jnp.max(logits, axis=1, keepdims=True)                        # (B, 1, H)
    p = jnp.exp(logits - m)
    denom = jnp.sum(p, axis=1, keepdims=True)
    attn = p * pl.reciprocal(denom, approx=True)                      # (B, n, H)

    # Broadcast head weights across value lanes, multiply by V, reduce over n.
    attn_lanes = jnp.dot(attn.reshape(B * n, NHEADS), head_expand,
                         preferred_element_type=jnp.float32).reshape(B, n, VALUE_DIM)
    out = jnp.sum(attn_lanes * v3, axis=1)                            # (B, VDIM)

    if RESIDUAL:
        wf = wslab_ref[:, _OFF_WF:_OFF_WF + QUERY_DIM]                # (VDIM, QDIM)
        wr1 = wslab_ref[:, _OFF_WR1:_OFF_WR1 + FFN_DIM]               # (QDIM, FFN)
        out = jnp.dot(out, wf, preferred_element_type=jnp.float32) + bf
        if NORM_BEFORE:
            out = res + out
            res2 = out
            normed = _layer_norm(out, g2, be2)
            h1 = jnp.maximum(
                jnp.dot(normed, wr1, preferred_element_type=jnp.float32) + br1,
                0.0)
            out = res2 + jnp.dot(h1, wr2_ref[...],
                                 preferred_element_type=jnp.float32) + br2
        else:
            out = _layer_norm(res + out, g1, be1)
            res2 = out
            h1 = jnp.maximum(
                jnp.dot(out, wr1, preferred_element_type=jnp.float32) + br1,
                0.0)
            out = _layer_norm(
                res2 + jnp.dot(h1, wr2_ref[...],
                               preferred_element_type=jnp.float32) + br2,
                g2, be2)

    o_ref[...] = out


def pack_params(p):
    """ONE-TIME (init-time) packing — never call this inside the per-step jit.

    Produces:
      wslab: (32, 512) f32 slab = [wq*scale | wk | wv | wr1 | wf | head_sum | head_expand]
      wr2:   (128, 32) f32
      vec:   (9, 128)  f32 bias / LayerNorm vector table (bq already scaled)
    """
    scale = (1.0 / math.sqrt(HEAD_DIM)) if SQRT else 1.0
    wq_s = np.asarray(p["wq"], np.float32) * scale
    bq_s = np.asarray(p["bq"], np.float32) * scale

    wslab = np.zeros((QUERY_DIM, _WSLAB_LANES), np.float32)
    wslab[:, _OFF_WQKV:_OFF_WQKV + DIM] = wq_s
    wslab[:, _OFF_WQKV + DIM:_OFF_WQKV + 2 * DIM] = np.asarray(p["wk"], np.float32)
    wslab[:, _OFF_WQKV + 2 * DIM:_OFF_WQKV + 2 * DIM + VALUE_DIM] = (
        np.asarray(p["wv"], np.float32))
    wslab[:, _OFF_WR1:_OFF_WR1 + FFN_DIM] = np.asarray(p["wr1"], np.float32)
    wslab[:, _OFF_WF:_OFF_WF + QUERY_DIM] = np.asarray(p["wf"], np.float32)

    d = np.arange(DIM)
    h = np.arange(NHEADS)
    wslab[:, _OFF_HSUM:_OFF_HSUM + NHEADS] = (
        (d[:, None] // HEAD_DIM) == h[None, :]).astype(np.float32)
    wslab[0:NHEADS, _OFF_HEXP:_OFF_HEXP + VALUE_DIM] = (
        h[:, None] == (np.arange(VALUE_DIM)[None, :] // V_HEAD_DIM)
    ).astype(np.float32)

    def row(*vs):
        v = np.concatenate([np.asarray(u, np.float32).reshape(-1) for u in vs])
        return np.pad(v, (0, _VEC_LANES - v.shape[0]))

    vec = np.stack([
        row(bq_s),                    # _ROW_BQ  (scale folded in)
        row(p["bk"], p["bv"]),        # _ROW_BKV
        row(p["bf"]),                 # _ROW_BF
        row(p["g1"]),                 # _ROW_G1
        row(p["be1"]),                # _ROW_BE1
        row(p["g2"]),                 # _ROW_G2
        row(p["be2"]),                # _ROW_BE2
        row(p["br1"]),                # _ROW_BR1
        row(p["br2"]),                # _ROW_BR2
    ]).astype(np.float32)             # (9, 128)

    return (jnp.asarray(wslab),
            jnp.asarray(p["wr2"], jnp.float32),
            jnp.asarray(vec))


@jax.jit
def self_attention_pallas(query, x, wslab, wr2, vec):
    bsz = query.shape[0]
    n = x.shape[1]
    out_dim = QUERY_DIM if RESIDUAL else VALUE_DIM

    # Lane-dense 2-D activations; the whole problem (<100 KiB) lives in VMEM,
    # so the call stays grid-less (single invocation, whole-array blocks).
    q2 = query.reshape(bsz, query.shape[2])
    x2 = x.reshape(bsz * n, x.shape[2])

    vmem = pltpu.MemorySpace.VMEM
    out2 = pl.pallas_call(
        self_attention_kernel,
        out_shape=jax.ShapeDtypeStruct((bsz, out_dim), jnp.float32),
        in_specs=[pl.BlockSpec(memory_space=vmem)] * 5,
        out_specs=pl.BlockSpec(memory_space=vmem),
        scratch_shapes=[pltpu.VMEM((bsz + bsz * n, IN_DIM), jnp.float32)],
        cost_estimate=pl.CostEstimate(
            flops=160_000, transcendentals=128, bytes_accessed=90_000),
    )(q2, x2, wslab, wr2, vec)

    return out2.reshape(bsz, 1, out_dim)


# ---------------- pure-JAX reference (mirrors the PyTorch forward) ------------
def self_attention_ref(query, x, p):
    res = query
    q_in = _layer_norm(query, p["g1"], p["be1"]) if NORM_BEFORE else query
    q = q_in @ p["wq"] + p["bq"]                      # (B, 1, DIM)
    bsz = x.shape[0]
    q = q.reshape(bsz, 1, NHEADS, HEAD_DIM).transpose(0, 2, 1, 3)
    if SQRT:
        q = q / math.sqrt(HEAD_DIM)
    k = (x @ p["wk"] + p["bk"]).reshape(bsz, N, NHEADS, HEAD_DIM).transpose(0, 2, 3, 1)
    v = (x @ p["wv"] + p["bv"]).reshape(bsz, N, NHEADS, V_HEAD_DIM).transpose(0, 2, 1, 3)
    score = jax.nn.softmax(q @ k, axis=-1)
    out = score @ v                                   # (B, H, 1, V_HEAD_DIM)
    out = out.transpose(0, 2, 1, 3).reshape(bsz, 1, VALUE_DIM)
    if RESIDUAL:
        out = out @ p["wf"] + p["bf"]
        if NORM_BEFORE:
            out = res + out
            res2 = out
            nrm = _layer_norm(out, p["g2"], p["be2"])
            ffn = jnp.maximum(nrm @ p["wr1"] + p["br1"], 0.0) @ p["wr2"] + p["br2"]
            out = res2 + ffn
        else:
            out = _layer_norm(res + out, p["g1"], p["be1"])
            res2 = out
            ffn = jnp.maximum(out @ p["wr1"] + p["br1"], 0.0) @ p["wr2"] + p["br2"]
            out = _layer_norm(res2 + ffn, p["g2"], p["be2"])
    return out


def make_params(key):
    keys = jax.random.split(key, 16)

    def lin(k, fan_in, fan_out):
        s = 1.0 / math.sqrt(fan_in)
        kw, kb = jax.random.split(k)
        w = jax.random.uniform(kw, (fan_in, fan_out), jnp.float32, -s, s)
        b = jax.random.uniform(kb, (1, fan_out), jnp.float32, -s, s)
        return w, b

    p = {}
    p["wq"], p["bq"] = lin(keys[0], QUERY_DIM, DIM)
    p["wk"], p["bk"] = lin(keys[1], IN_DIM, DIM)
    p["wv"], p["bv"] = lin(keys[2], IN_DIM, VALUE_DIM)
    p["wf"], p["bf"] = lin(keys[3], VALUE_DIM, QUERY_DIM)
    p["wr1"], p["br1"] = lin(keys[4], QUERY_DIM, FFN_DIM)
    p["wr2"], p["br2"] = lin(keys[5], FFN_DIM, QUERY_DIM)
    p["g1"] = jnp.ones((1, QUERY_DIM), jnp.float32)
    p["be1"] = jnp.zeros((1, QUERY_DIM), jnp.float32)
    p["g2"] = jnp.ones((1, QUERY_DIM), jnp.float32)
    p["be2"] = jnp.zeros((1, QUERY_DIM), jnp.float32)
    return p


if __name__ == "__main__":
    root = jax.random.PRNGKey(0)
    k_q, k_x, k_p = jax.random.split(root, 3)

    query = jax.random.normal(k_q, (BSZ, 1, QUERY_DIM), jnp.float32)
    x = jax.random.normal(k_x, (BSZ, N, IN_DIM), jnp.float32)
    params = make_params(k_p)

    # One-time packing at init (outside the per-call jit).
    wslab, wr2, vec = pack_params(params)

    out = jax.block_until_ready(self_attention_pallas(query, x, wslab, wr2, vec))
    ref = jax.block_until_ready(self_attention_ref(query, x, params))

    assert out.shape == (BSZ, 1, QUERY_DIM if RESIDUAL else VALUE_DIM)
    max_err = float(jnp.max(jnp.abs(out - ref)))
    # Tolerance accounts for the approximate (EUP) reciprocal in the softmax.
    assert max_err < 2e-3, f"max abs err {max_err}"

    print("KERNEL_OK")
</pallas_src>

<mosaic_0001>
module attributes {stable_mosaic.version = 11 : i64} {
  func.func @self_attention_kernel(%arg0: memref<2x32xf32, #tpu.memory_space<vmem>>, %arg1: memref<16x32xf32, #tpu.memory_space<vmem>>, %arg2: memref<32x512xf32, #tpu.memory_space<vmem>>, %arg3: memref<128x32xf32, #tpu.memory_space<vmem>>, %arg4: memref<9x128xf32, #tpu.memory_space<vmem>>, %arg5: memref<2x32xf32, #tpu.memory_space<vmem>>, %arg6: memref<18x32xf32, #tpu.memory_space<vmem>>) attributes {dimension_semantics = [], scalar_prefetch = 0 : i64, scratch_operands = 1 : i64, tpu.core_type = #tpu.core_type<tc>} {
    %c0 = arith.constant 0 : index
    %c0_0 = arith.constant 0 : index
    %0 = vector.load %arg0[%c0, %c0_0] : memref<2x32xf32, #tpu.memory_space<vmem>>, vector<2x32xf32>
    %c0_1 = arith.constant 0 : index
    %c0_2 = arith.constant 0 : index
    %1 = vector.load %arg1[%c0_1, %c0_2] : memref<16x32xf32, #tpu.memory_space<vmem>>, vector<16x32xf32>
    %c0_3 = arith.constant 0 : index
    %c0_4 = arith.constant 0 : index
    %2 = vector.load %arg4[%c0_3, %c0_4] : memref<9x128xf32, #tpu.memory_space<vmem>>, vector<1x32xf32>
    %c1 = arith.constant 1 : index
    %c0_5 = arith.constant 0 : index
    %3 = vector.load %arg4[%c1, %c0_5] : memref<9x128xf32, #tpu.memory_space<vmem>>, vector<1x64xf32>
    %c2 = arith.constant 2 : index
    %c0_6 = arith.constant 0 : index
    %4 = vector.load %arg4[%c2, %c0_6] : memref<9x128xf32, #tpu.memory_space<vmem>>, vector<1x32xf32>
    %c3 = arith.constant 3 : index
    %c0_7 = arith.constant 0 : index
    %5 = vector.load %arg4[%c3, %c0_7] : memref<9x128xf32, #tpu.memory_space<vmem>>, vector<1x32xf32>
    %c4 = arith.constant 4 : index
    %c0_8 = arith.constant 0 : index
    %6 = vector.load %arg4[%c4, %c0_8] : memref<9x128xf32, #tpu.memory_space<vmem>>, vector<1x32xf32>
    %c5 = arith.constant 5 : index
    %c0_9 = arith.constant 0 : index
    %7 = vector.load %arg4[%c5, %c0_9] : memref<9x128xf32, #tpu.memory_space<vmem>>, vector<1x32xf32>
    %c6 = arith.constant 6 : index
    %c0_10 = arith.constant 0 : index
    %8 = vector.load %arg4[%c6, %c0_10] : memref<9x128xf32, #tpu.memory_space<vmem>>, vector<1x32xf32>
    %c7 = arith.constant 7 : index
    %c0_11 = arith.constant 0 : index
    %9 = vector.load %arg4[%c7, %c0_11] : memref<9x128xf32, #tpu.memory_space<vmem>>, vector<1x128xf32>
    %c8 = arith.constant 8 : index
    %c0_12 = arith.constant 0 : index
    %10 = vector.load %arg4[%c8, %c0_12] : memref<9x128xf32, #tpu.memory_space<vmem>>, vector<1x32xf32>
    %cst = arith.constant dense<0.000000e+00> : vector<2xf32>
    %11 = vector.multi_reduction <add>, %0, %cst [1] : vector<2x32xf32> to vector<2xf32>
    %12 = vector.shape_cast %11 : vector<2xf32> to vector<2x1xf32>
    %cst_13 = arith.constant 3.200000e+01 : f32
    %13 = vector.broadcast %cst_13 : f32 to vector<2x1xf32>
    %14 = arith.divf %12, %13 : vector<2x1xf32>
    %15 = vector.broadcast %14 : vector<2x1xf32> to vector<2x32xf32>
    %16 = arith.subf %0, %15 : vector<2x32xf32>
    %17 = arith.mulf %16, %16 : vector<2x32xf32>
    %cst_14 = arith.constant dense<0.000000e+00> : vector<2xf32>
    %18 = vector.multi_reduction <add>, %17, %cst_14 [1] : vector<2x32xf32> to vector<2xf32>
    %19 = vector.shape_cast %18 : vector<2xf32> to vector<2x1xf32>
    %cst_15 = arith.constant 3.200000e+01 : f32
    %20 = vector.broadcast %cst_15 : f32 to vector<2x1xf32>
    %21 = arith.divf %19, %20 : vector<2x1xf32>
    %22 = vector.broadcast %14 : vector<2x1xf32> to vector<2x32xf32>
    %23 = arith.subf %0, %22 : vector<2x32xf32>
    %cst_16 = arith.constant 9.99999974E-6 : f32
    %24 = vector.broadcast %cst_16 : f32 to vector<2x1xf32>
    %25 = arith.addf %21, %24 : vector<2x1xf32>
    %26 = math.rsqrt %25 : vector<2x1xf32>
    %27 = vector.broadcast %26 : vector<2x1xf32> to vector<2x32xf32>
    %28 = arith.mulf %23, %27 : vector<2x32xf32>
    %29 = vector.broadcast %5 : vector<1x32xf32> to vector<2x32xf32>
    %30 = arith.mulf %28, %29 : vector<2x32xf32>
    %31 = vector.broadcast %6 : vector<1x32xf32> to vector<2x32xf32>
    %32 = arith.addf %30, %31 : vector<2x32xf32>
    %c0_17 = arith.constant 0 : index
    %c0_18 = arith.constant 0 : index
    %33 = vector.load %arg6[%c0_17, %c0_18] : memref<18x32xf32, #tpu.memory_space<vmem>>, vector<2x32xf32>
    tpu.vector_store %arg6[%c0_17, %c0_18], %32 {strides = array<i32>} : memref<18x32xf32, #tpu.memory_space<vmem>>, vector<2x32xf32>,
    %c2_19 = arith.constant 2 : index
    %c0_20 = arith.constant 0 : index
    %34 = vector.load %arg6[%c2_19, %c0_20] : memref<18x32xf32, #tpu.memory_space<vmem>>, vector<16x32xf32>
    tpu.vector_store %arg6[%c2_19, %c0_20], %1 {strides = array<i32>} : memref<18x32xf32, #tpu.memory_space<vmem>>, vector<16x32xf32>,
    %c0_21 = arith.constant 0 : index
    %c0_22 = arith.constant 0 : index
    %35 = vector.load %arg2[%c0_21, %c0_22] : memref<32x512xf32, #tpu.memory_space<vmem>>, vector<32x96xf32>
    %c0_23 = arith.constant 0 : index
    %c0_24 = arith.constant 0 : index
    %36 = vector.load %arg6[%c0_23, %c0_24] : memref<18x32xf32, #tpu.memory_space<vmem>>, vector<18x32xf32>
    %cst_25 = arith.constant dense<0.000000e+00> : vector<18x96xf32>
    %37 = tpu.matmul %36, %35, %cst_25 {dimension_numbers = #tpu.dot_dimension_numbers<[1], [0], [0], [1], [0, 0, 1, 1], [], []>} : vector<18x32xf32>, vector<32x96xf32>, vector<18x96xf32> -> vector<18x96xf32>
    %38 = vector.extract_strided_slice %37 {offsets = [0, 0], sizes = [2, 32], strides = [1, 1]} : vector<18x96xf32> to vector<2x32xf32>
    %39 = vector.broadcast %2 : vector<1x32xf32> to vector<2x32xf32>
    %40 = arith.addf %38, %39 : vector<2x32xf32>
    %41 = vector.extract_strided_slice %37 {offsets = [2, 32], sizes = [16, 64], strides = [1, 1]} : vector<18x96xf32> to vector<16x64xf32>
    %42 = vector.broadcast %3 : vector<1x64xf32> to vector<16x64xf32>
    %43 = arith.addf %41, %42 : vector<16x64xf32>
    %44 = vector.extract_strided_slice %43 {offsets = [0, 0], sizes = [16, 32], strides = [1, 1]} : vector<16x64xf32> to vector<16x32xf32>
    %45 = vector.shape_cast %44 : vector<16x32xf32> to vector<2x8x32xf32>
    %46 = vector.extract_strided_slice %43 {offsets = [0, 32], sizes = [16, 32], strides = [1, 1]} : vector<16x64xf32> to vector<16x32xf32>
    %47 = vector.shape_cast %46 : vector<16x32xf32> to vector<2x8x32xf32>
    %c0_26 = arith.constant 0 : index
    %c288 = arith.constant 288 : index
    %48 = vector.load %arg2[%c0_26, %c288] : memref<32x512xf32, #tpu.memory_space<vmem>>, vector<32x4xf32>
    %c0_27 = arith.constant 0 : index
    %c384 = arith.constant 384 : index
    %49 = vector.load %arg2[%c0_27, %c384] : memref<32x512xf32, #tpu.memory_space<vmem>>, vector<4x32xf32>
    %50 = vector.shape_cast %40 : vector<2x32xf32> to vector<2x1x32xf32>
    %51 = vector.broadcast %50 : vector<2x1x32xf32> to vector<2x8x32xf32>
    %52 = arith.mulf %51, %45 : vector<2x8x32xf32>
    %53 = vector.shape_cast %52 : vector<2x8x32xf32> to vector<16x32xf32>
    %cst_28 = arith.constant dense<0.000000e+00> : vector<16x4xf32>
    %54 = tpu.matmul %53, %48, %cst_28 {dimension_numbers = #tpu.dot_dimension_numbers<[1], [0], [0], [1], [0, 0, 1, 1], [], []>} : vector<16x32xf32>, vector<32x4xf32>, vector<16x4xf32> -> vector<16x4xf32>
    %55 = vector.shape_cast %54 : vector<16x4xf32> to vector<2x8x4xf32>
    %cst_29 = arith.constant dense<0xFF800000> : vector<2x4xf32>
    %56 = vector.multi_reduction <maximumf>, %55, %cst_29 [1] : vector<2x8x4xf32> to vector<2x4xf32>
    %57 = vector.shape_cast %56 : vector<2x4xf32> to vector<2x1x4xf32>
    %58 = vector.broadcast %57 : vector<2x1x4xf32> to vector<2x8x4xf32>
    %59 = arith.subf %55, %58 : vector<2x8x4xf32>
    %60 = math.exp %59 : vector<2x8x4xf32>
    %cst_30 = arith.constant dense<0.000000e+00> : vector<2x4xf32>
    %61 = vector.multi_reduction <add>, %60, %cst_30 [1] : vector<2x8x4xf32> to vector<2x4xf32>
    %62 = vector.shape_cast %61 : vector<2x4xf32> to vector<2x1x4xf32>
    %63 = tpu.reciprocal %62 {approx = true} : vector<2x1x4xf32> -> vector<2x1x4xf32>
    %64 = vector.broadcast %63 : vector<2x1x4xf32> to vector<2x8x4xf32>
    %65 = arith.mulf %60, %64 : vector<2x8x4xf32>
    %66 = vector.shape_cast %65 : vector<2x8x4xf32> to vector<16x4xf32>
    %cst_31 = arith.constant dense<0.000000e+00> : vector<16x32xf32>
    %67 = tpu.matmul %66, %49, %cst_31 {dimension_numbers = #tpu.dot_dimension_numbers<[1], [0], [0], [1], [0, 0, 1, 1], [], []>} : vector<16x4xf32>, vector<4x32xf32>, vector<16x32xf32> -> vector<16x32xf32>
    %68 = vector.shape_cast %67 : vector<16x32xf32> to vector<2x8x32xf32>
    %69 = arith.mulf %68, %47 : vector<2x8x32xf32>
    %cst_32 = arith.constant dense<0.000000e+00> : vector<2x32xf32>
    %70 = vector.multi_reduction <add>, %69, %cst_32 [1] : vector<2x8x32xf32> to vector<2x32xf32>
    %c0_33 = arith.constant 0 : index
    %c256 = arith.constant 256 : index
    %71 = vector.load %arg2[%c0_33, %c256] : memref<32x512xf32, #tpu.memory_space<vmem>>, vector<32x32xf32>
    %c0_34 = arith.constant 0 : index
    %c128 = arith.constant 128 : index
    %72 = vector.load %arg2[%c0_34, %c128] : memref<32x512xf32, #tpu.memory_space<vmem>>, vector<32x128xf32>
    %cst_35 = arith.constant dense<0.000000e+00> : vector<2x32xf32>
    %73 = tpu.matmul %70, %71, %cst_35 {dimension_numbers = #tpu.dot_dimension_numbers<[1], [0], [0], [1], [0, 0, 1, 1], [], []>} : vector<2x32xf32>, vector<32x32xf32>, vector<2x32xf32> -> vector<2x32xf32>
    %74 = vector.broadcast %4 : vector<1x32xf32> to vector<2x32xf32>
    %75 = arith.addf %73, %74 : vector<2x32xf32>
    %76 = arith.addf %0, %75 : vector<2x32xf32>
    %cst_36 = arith.constant dense<0.000000e+00> : vector<2xf32>
    %77 = vector.multi_reduction <add>, %76, %cst_36 [1] : vector<2x32xf32> to vector<2xf32>
    %78 = vector.shape_cast %77 : vector<2xf32> to vector<2x1xf32>
    %cst_37 = arith.constant 3.200000e+01 : f32
    %79 = vector.broadcast %cst_37 : f32 to vector<2x1xf32>
    %80 = arith.divf %78, %79 : vector<2x1xf32>
    %81 = vector.broadcast %80 : vector<2x1xf32> to vector<2x32xf32>
    %82 = arith.subf %76, %81 : vector<2x32xf32>
    %83 = arith.mulf %82, %82 : vector<2x32xf32>
    %cst_38 = arith.constant dense<0.000000e+00> : vector<2xf32>
    %84 = vector.multi_reduction <add>, %83, %cst_38 [1] : vector<2x32xf32> to vector<2xf32>
    %85 = vector.shape_cast %84 : vector<2xf32> to vector<2x1xf32>
    %cst_39 = arith.constant 3.200000e+01 : f32
    %86 = vector.broadcast %cst_39 : f32 to vector<2x1xf32>
    %87 = arith.divf %85, %86 : vector<2x1xf32>
    %88 = vector.broadcast %80 : vector<2x1xf32> to vector<2x32xf32>
    %89 = arith.subf %76, %88 : vector<2x32xf32>
    %cst_40 = arith.constant 9.99999974E-6 : f32
    %90 = vector.broadcast %cst_40 : f32 to vector<2x1xf32>
    %91 = arith.addf %87, %90 : vector<2x1xf32>
    %92 = math.rsqrt %91 : vector<2x1xf32>
    %93 = vector.broadcast %92 : vector<2x1xf32> to vector<2x32xf32>
    %94 = arith.mulf %89, %93 : vector<2x32xf32>
    %95 = vector.broadcast %7 : vector<1x32xf32> to vector<2x32xf32>
    %96 = arith.mulf %94, %95 : vector<2x32xf32>
    %97 = vector.broadcast %8 : vector<1x32xf32> to vector<2x32xf32>
    %98 = arith.addf %96, %97 : vector<2x32xf32>
    %cst_41 = arith.constant dense<0.000000e+00> : vector<2x128xf32>
    %99 = tpu.matmul %98, %72, %cst_41 {dimension_numbers = #tpu.dot_dimension_numbers<[1], [0], [0], [1], [0, 0, 1, 1], [], []>} : vector<2x32xf32>, vector<32x128xf32>, vector<2x128xf32> -> vector<2x128xf32>
    %100 = vector.broadcast %9 : vector<1x128xf32> to vector<2x128xf32>
    %101 = arith.addf %99, %100 : vector<2x128xf32>
    %cst_42 = arith.constant 0.000000e+00 : f32
    %102 = vector.broadcast %cst_42 : f32 to vector<2x128xf32>
    %103 = arith.maximumf %101, %102 : vector<2x128xf32>
    %c0_43 = arith.constant 0 : index
    %c0_44 = arith.constant 0 : index
    %104 = vector.load %arg3[%c0_43, %c0_44] : memref<128x32xf32, #tpu.memory_space<vmem>>, vector<128x32xf32>
    %cst_45 = arith.constant dense<0.000000e+00> : vector<2x32xf32>
    %105 = tpu.matmul %103, %104, %cst_45 {dimension_numbers = #tpu.dot_dimension_numbers<[1], [0], [0], [1], [0, 0, 1, 1], [], []>} : vector<2x128xf32>, vector<128x32xf32>, vector<2x32xf32> -> vector<2x32xf32>
    %106 = arith.addf %76, %105 : vector<2x32xf32>
    %107 = vector.broadcast %10 : vector<1x32xf32> to vector<2x32xf32>
    %108 = arith.addf %106, %107 : vector<2x32xf32>
    %c0_46 = arith.constant 0 : index
    %c0_47 = arith.constant 0 : index
    %109 = vector.load %arg5[%c0_46, %c0_47] : memref<2x32xf32, #tpu.memory_space<vmem>>, vector<2x32xf32>
    tpu.vector_store %arg5[%c0_46, %c0_47], %108 {strides = array<i32>} : memref<2x32xf32, #tpu.memory_space<vmem>>, vector<2x32xf32>,
    return
  }
}

</mosaic_0001>

<llo_original>
// kernel: self_attention_pallas.1
$region0: #{self_attention_pallas.1}
  #allocation0 [shape = 'u32[]', space=smem, size = 0x4, offset = 0x4, fixed_abs, tag = 'smem constant byte address 0x4 - core index']
  #allocation1 [shape = 'u32[144,128]{1,0:T(1,128)}', space=vmem, size = 0x12000, scoped, tag = 'internal scratch']
  #allocation2 [shape = 'f32[18,32]{1,0:T(8,128)}', space=vmem, size = 0x3000, scoped, tag = 'scratch operand']
  %s0 = inlined_call_operand.vmem [shape: f32[2,32], index: 0, kind: input, shape index: {}]
  %s1 = inlined_call_operand.vmem [shape: f32[16,32], index: 1, kind: input, shape index: {}]
  %s2 = inlined_call_operand.vmem [shape: f32[32,512], index: 2, kind: input, shape index: {}]
  %s3 = inlined_call_operand.vmem [shape: f32[128,32], index: 3, kind: input, shape index: {}]
  %s4 = inlined_call_operand.vmem [shape: f32[9,128], index: 4, kind: input, shape index: {}]
  %s5 = inlined_call_operand.hbm [shape: f32[2,32], index: 5, kind: output, shape index: {}]
  %s6 = sld [smem:[#allocation0]]
  $region30: #{self_attention_pallas.1} parent=0
    _
  %s8 = ssub.s32 1, %s6
  %s9 = scalar_select 0, %s8, %s6
  $region1: #{self_attention_pallas.1} parent=0
    #allocation3 [shape = 'u8[1024]{0}', space=vmem, size = 0x400, scoped, tag = 'output window, operand 0, single buffered']
    #allocation4 [shape = 's32[1]{0}', space=sflag, size = 0x4, scoped, tag = 'scoped memory for self_attention_pallas.1']
    %10 = vsyncpa [#allocation4], 0
    // Predicated region
    $region2: #{self_attention_pallas.1} parent=1 // pred_check
      _
    $region3: #{self_attention_pallas.1} parent=1 // pred_check_branch
      %12 = sbr.rel (0) target = $region5
    $region4: #{self_attention_pallas.1} parent=1 // pred_region
      _
    $region5: #{self_attention_pallas.1} parent=1 // pred_fallthru
      _
    // Predicated region
    $region6: #{self_attention_pallas.1} parent=1 // pred_check
      _
    $region7: #{self_attention_pallas.1} parent=1 // pred_check_branch
      %14 = sbr.rel (0) target = $region9
    $region8: #{self_attention_pallas.1} parent=1 // pred_region
      _
    $region9: #{self_attention_pallas.1} parent=1 // pred_fallthru
      _
    // Predicated region
    $region10: #{self_attention_pallas.1} parent=1 // pred_check
      _
    $region11: #{self_attention_pallas.1} parent=1 // pred_check_branch
      %16 = sbr.rel (0) target = $region13
    $region12: #{self_attention_pallas.1} parent=1 // pred_region
      _
    $region13: #{self_attention_pallas.1} parent=1 // pred_fallthru
      _
    // Predicated region
    $region14: #{self_attention_pallas.1} parent=1 // pred_check
      _
    $region15: #{self_attention_pallas.1} parent=1 // pred_check_branch
      %18 = sbr.rel (0) target = $region17
    $region16: #{self_attention_pallas.1} parent=1 // pred_region
      _
    $region17: #{self_attention_pallas.1} parent=1 // pred_fallthru
      _
    // Predicated region
    $region18: #{self_attention_pallas.1} parent=1 // pred_check
      _
    $region19: #{self_attention_pallas.1} parent=1 // pred_check_branch
      %20 = sbr.rel (0) target = $region21
    $region20: #{self_attention_pallas.1} parent=1 // pred_region
      _
    $region21: #{self_attention_pallas.1} parent=1 // pred_fallthru
      _
    %v21 = vld [vmem:[%s0] sm:$0x3]
    %v22 = vld [vmem:[%s1] sm:$0xff]
    %v23 = vld [vmem:[%s1 + $0x8] sm:$0xff]
    %v24 = vld [vmem:[%s4] sm:$0x1]
    %v25 = vld [vmem:[%s4 + $0x1] sm:$0x1]
    %v26 = vld [vmem:[%s4 + $0x2] sm:$0x1]
    %v27 = vld [vmem:[%s4 + $0x3] sm:$0x1]
    %v28 = vld [vmem:[%s4 + $0x4] sm:$0x1]
    %v29 = vld [vmem:[%s4 + $0x5] sm:$0x1]
    %v30 = vld [vmem:[%s4 + $0x6] sm:$0x1]
    %v31 = vld [vmem:[%s4 + $0x7] sm:$0x1]
    %v32 = vld [vmem:[%s4 + $0x8] sm:$0x1]
    %vm33 = vcmask 254976
    %v34 = vsel %vm33, %v21, 0.0
    %35 = vadd.xlane.f32.xlu0 %v34
    %v36 = vpop.xlane.xlu0 %35
    %v37 = vrcp.pop 32.0
    %v38 = vmul.f32 %v36, %v37
    %v39 = vsub.f32 %v21, %v38
    %v40 = vmul.f32 %v39, %v39
    %v41 = vsel %vm33, %v40, 0.0
    %42 = vadd.xlane.f32.xlu0 %v41
    %v43 = vpop.xlane.xlu0 %42
    %v44 = vmul.f32 %v43, %v37
    %v45 = vadd.f32 %v44, 1e-05
    %v46 = vrsqrt.pop %v45
    %v47 = vmul.f32 %v39, %v46
    %v48 = vlaneseq
    %v49 = vshrl.u32 %v48, 7
    %v50 = vsub.s32 0, %v49
    %v51 = vrot.slane %v27, %v50
    %v52 = vmul.f32 %v47, %v51
    %v53 = vlaneseq
    %v54 = vshrl.u32 %v53, 7
    %v55 = vsub.s32 0, %v54
    %v56 = vrot.slane %v28, %v55
    %v57 = vadd.f32 %v52, %v56
    %58 = vst.msk [vmem:[#allocation2] sm:$0x3] %vm33, %v57
    %vm59 = vcmask 261120
    %60 = vst.msk [vmem:[#allocation2 + $0x2] sm:$0xff] %vm59, %v22
    %61 = vst.msk [vmem:[#allocation2 + $0xa] sm:$0xff] %vm59, %v23
    %v62 = vld [vmem:[%s2] sm:$0xff]
    %v63 = vld [vmem:[%s2 + $0x20] sm:$0xff]
    %v64 = vld [vmem:[%s2 + $0x40] sm:$0xff]
    %v65 = vld [vmem:[%s2 + $0x60] sm:$0xff]
    %v66 = vld [vmem:[#allocation2] sm:$0xff]
    %v67 = vld [vmem:[#allocation2 + $0x8] sm:$0xff]
    %v68 = vld [vmem:[#allocation2 + $0x10] sm:$0x3]
    %v70 = vsel %vm59, %v66, 0
    %v73 = vsel %vm59, %v67, 0
    %v76 = vsel %vm59, %v68, 0
    %78 = vmatprep.subr.mxu0 0.0
    %79 = vmatpush1.msra.mxu0 %v62
    %80 = vmatprep.subr.mxu0 0.0
    %81 = vmatpush1.msra.mxu0 %v63
    %82 = vmatprep.subr.mxu0 0.0
    %83 = vmatpush1.msra.mxu0 %v64
    %84 = vmatprep.subr.mxu0 0.0
    %85 = vmatpush1.msra.mxu0 %v65
    %86 = vmatprep.subr.mxu0 0.0
    %87 = vmatpush1.msra.mxu0 0.0
    %88 = vmatprep.subr.mxu0 0.0
    %89 = vmatpush1.msra.mxu0 0.0
    %90 = vmatprep.subr.mxu0 0.0
    %91 = vmatpush1.msra.mxu0 0.0
    %92 = vmatprep.subr.mxu0 0.0
    %93 = vmatpush1.msra.mxu0 0.0
    %94 = vmatprep.subr.mxu0 0.0
    %95 = vmatpush1.msra.mxu0 0.0
    %96 = vmatprep.subr.mxu0 0.0
    %97 = vmatpush1.msra.mxu0 0.0
    %98 = vmatprep.subr.mxu0 0.0
    %99 = vmatpush1.msra.mxu0 0.0
    %100 = vmatprep.subr.mxu0 0.0
    %101 = vmatpush1.msra.mxu0 0.0
    %102 = vmatprep.subr.mxu0 0.0
    %103 = vmatpush1.msra.mxu0 0.0
    %104 = vmatprep.subr.mxu0 0.0
    %105 = vmatpush1.msra.mxu0 0.0
    %106 = vmatprep.subr.mxu0 0.0
    %107 = vmatpush1.msra.mxu0 0.0
    %108 = vmatprep.subr.mxu0 0.0
    %109 = vmatpush1.msra.mxu0 0.0
    %110 = vmatprep.subr.mxu0 0.0
    %111 = vmatpush1.msra.mxu0 0.0
    %112 = vmatprep.subr.mxu0 0.0
    %113 = vmatpush1.msra.mxu0 0.0
    %114 = vmatprep.subr.mxu0 0.0
    %115 = vmatpush1.msra.mxu0 0.0
    %116 = vmatprep.subr.mxu0 0.0
    %117 = vmatpush1.msra.mxu0 0.0
    %118 = vmatprep.subr.mxu0 0.0
    %119 = vmatpush1.msra.mxu0 0.0
    %120 = vmatprep.subr.mxu0 0.0
    %121 = vmatpush1.msra.mxu0 0.0
    %122 = vmatprep.subr.mxu0 0.0
    %123 = vmatpush1.msra.mxu0 0.0
    %124 = vmatprep.subr.mxu0 0.0
    %125 = vmatpush1.msra.mxu0 0.0
    %126 = vmatprep.subr.mxu0 0.0
    %127 = vmatpush1.msra.mxu0 0.0
    %128 = vmatprep.subr.mxu0 0.0
    %129 = vmatpush1.msra.mxu0 0.0
    %130 = vmatprep.subr.mxu0 0.0
    %131 = vmatpush1.msra.mxu0 0.0
    %132 = vmatprep.subr.mxu0 0.0
    %133 = vmatpush1.msra.mxu0 0.0
    %134 = vmatprep.subr.mxu0 0.0
    %135 = vmatpush1.msra.mxu0 0.0
    %136 = vmatprep.subr.mxu0 0.0
    %137 = vmatpush1.msra.mxu0 0.0
    %138 = vmatprep.subr.mxu0 0.0
    %139 = vmatpush1.msra.mxu0 0.0
    %140 = vmatprep.subr.mxu0 0.0
    %141 = vmatpush1.msra.mxu0 0.0
    %142 = vmatprep.mubr.f32.mxu0 0.0
    %143 = vmatmul.mubr.f32.gmra.mrb[0].mxu0 %v70
    %v144 = vpop.f32.mrb[0].mxu0
    %v145 = vadd.f32 0.0, %v144
    %v146 = vpop.f32.mrb[0].mxu0
    %147 = vmatprep.mubr.f32.mxu0 0.0
    %148 = vmatmul.mubr.f32.gmra.mrb[0].mxu0 %v73
    %v149 = vpop.f32.mrb[0].mxu0
    %v150 = vadd.f32 0.0, %v149
    %v151 = vpop.f32.mrb[0].mxu0
    %152 = vmatprep.mubr.f32.mxu0 0.0
    %153 = vmatmul.mubr.f32.gmra.mrb[0].mxu0 %v76
    %v154 = vpop.f32.mrb[0].mxu0
    %v155 = vadd.f32 0.0, %v154
    %v156 = vpop.f32.mrb[0].mxu0
    %157 = vdwg.mxu0
    %v158 = vlaneseq
    %v159 = vshrl.u32 %v158, 7
    %v160 = vsub.s32 0, %v159
    %v161 = vrot.slane %v24, %v160
    %v162 = vadd.f32 %v145, %v161
    %v163 = vlaneseq
    %v164 = vshrl.u32 %v163, 7
    %v165 = vsub.s32 0, %v164
    %v166 = vrot.slane %v25, %v165
    %168 = vrot.lane.b32.xlu0 %v166, 32
    %v169 = vpop.permute.xlu0 %168
    %v171 = vadd.f32 %v145, %v169
    %v172 = vadd.f32 %v150, %v169
    %v173 = vadd.f32 %v155, %v169
    %vm177 = vcmask 1045504
    %v178 = vrot.slane %v171, 2
    %v179 = vrot.slane %v172, 2
    %v180 = vsel %vm177, %v178, %v179
    %v181 = vrot.slane %v173, 2
    %v182 = vsel %vm177, %v179, %v181
    %v183 = vld [vmem:[%s2 + $0x10] sm:$0xff]
    %v184 = vld [vmem:[%s2 + $0x30] sm:$0xff]
    %v185 = vld [vmem:[%s2 + $0x50] sm:$0xff]
    %v186 = vld [vmem:[%s2 + $0x70] sm:$0xff]
    %v187 = vld [vmem:[%s2 + $0x18] sm:$0xf]
    %v190 = vunpack.c.l.s4 1966171168
    %v191 = vunpack.c.0.s8 %v190
    %v192 = vlaneseq
    %v193 = vshrl.u32 %v192, 7
    %v194 = vsub.s32 %v191, %v193
    %v195 = vrot.slane %v162, %v194
    %v196 = vcombine.high %v195, %v195
    %v198 = vunpack.c.l.s4 1966171168
    %v199 = vunpack.c.0.s8 %v198
    %v200 = vlaneseq
    %v201 = vshrl.u32 %v200, 7
    %v202 = vsub.s32 %v199, %v201
    %v203 = vrot.slane %v195, %v202
    %v205 = vunpack.c.l.s4 1966171168
    %v206 = vunpack.c.0.s8 %v205
    %v207 = vlaneseq
    %v208 = vshrl.u32 %v207, 7
    %v209 = vsub.s32 %v206, %v208
    %v210 = vrot.slane %v196, %v209
    %v211 = vlaneseq
    %v212 = vshrl.u32 %v211, 7
    %v213 = vsub.s32 0, %v212
    %v214 = vrot.slane %v203, %v213
    %v215 = vlaneseq
    %v216 = vshrl.u32 %v215, 7
    %v217 = vsub.s32 0, %v216
    %v218 = vrot.slane %v210, %v217
    %221 = vrot.lane.b32.xlu0 %v180, 96
    %v222 = vpop.permute.xlu0 %221
    %223 = vrot.lane.b32.xlu0 %v182, 96
    %v224 = vpop.permute.xlu0 %223
    %v227 = vmul.f32 %v214, %v222
    %v228 = vmul.f32 %v218, %v224
    %233 = vrot.lane.b32.xlu0 %v183, 96
    %v234 = vpop.permute.xlu0 %233
    %235 = vrot.lane.b32.xlu0 %v184, 96
    %v236 = vpop.permute.xlu0 %235
    %237 = vrot.lane.b32.xlu0 %v185, 96
    %v238 = vpop.permute.xlu0 %237
    %239 = vrot.lane.b32.xlu0 %v186, 96
    %v240 = vpop.permute.xlu0 %239
    %v246 = vsel %vm59, %v227, 0
    %v249 = vsel %vm59, %v228, 0
    %251 = vmatprep.subr.mxu0 0.0
    %252 = vmatpush1.msra.mxu0 %v234
    %253 = vmatprep.subr.mxu0 0.0
    %254 = vmatpush1.msra.mxu0 %v236
    %255 = vmatprep.subr.mxu0 0.0
    %256 = vmatpush1.msra.mxu0 %v238
    %257 = vmatprep.subr.mxu0 0.0
    %258 = vmatpush1.msra.mxu0 %v240
    %259 = vmatprep.subr.mxu0 0.0
    %260 = vmatpush1.msra.mxu0 0.0
    %261 = vmatprep.subr.mxu0 0.0
    %262 = vmatpush1.msra.mxu0 0.0
    %263 = vmatprep.subr.mxu0 0.0
    %264 = vmatpush1.msra.mxu0 0.0
    %265 = vmatprep.subr.mxu0 0.0
    %266 = vmatpush1.msra.mxu0 0.0
    %267 = vmatprep.subr.mxu0 0.0
    %268 = vmatpush1.msra.mxu0 0.0
    %269 = vmatprep.subr.mxu0 0.0
    %270 = vmatpush1.msra.mxu0 0.0
    %271 = vmatprep.subr.mxu0 0.0
    %272 = vmatpush1.msra.mxu0 0.0
    %273 = vmatprep.subr.mxu0 0.0
    %274 = vmatpush1.msra.mxu0 0.0
    %275 = vmatprep.subr.mxu0 0.0
    %276 = vmatpush1.msra.mxu0 0.0
    %277 = vmatprep.subr.mxu0 0.0
    %278 = vmatpush1.msra.mxu0 0.0
    %279 = vmatprep.subr.mxu0 0.0
    %280 = vmatpush1.msra.mxu0 0.0
    %281 = vmatprep.subr.mxu0 0.0
    %282 = vmatpush1.msra.mxu0 0.0
    %283 = vmatprep.subr.mxu0 0.0
    %284 = vmatpush1.msra.mxu0 0.0
    %285 = vmatprep.subr.mxu0 0.0
    %286 = vmatpush1.msra.mxu0 0.0
    %287 = vmatprep.subr.mxu0 0.0
    %288 = vmatpush1.msra.mxu0 0.0
    %289 = vmatprep.subr.mxu0 0.0
    %290 = vmatpush1.msra.mxu0 0.0
    %291 = vmatprep.subr.mxu0 0.0
    %292 = vmatpush1.msra.mxu0 0.0
    %293 = vmatprep.subr.mxu0 0.0
    %294 = vmatpush1.msra.mxu0 0.0
    %295 = vmatprep.subr.mxu0 0.0
    %296 = vmatpush1.msra.mxu0 0.0
    %297 = vmatprep.subr.mxu0 0.0
    %298 = vmatpush1.msra.mxu0 0.0
    %299 = vmatprep.subr.mxu0 0.0
    %300 = vmatpush1.msra.mxu0 0.0
    %301 = vmatprep.subr.mxu0 0.0
    %302 = vmatpush1.msra.mxu0 0.0
    %303 = vmatprep.subr.mxu0 0.0
    %304 = vmatpush1.msra.mxu0 0.0
    %305 = vmatprep.subr.mxu0 0.0
    %306 = vmatpush1.msra.mxu0 0.0
    %307 = vmatprep.subr.mxu0 0.0
    %308 = vmatpush1.msra.mxu0 0.0
    %309 = vmatprep.subr.mxu0 0.0
    %310 = vmatpush1.msra.mxu0 0.0
    %311 = vmatprep.subr.mxu0 0.0
    %312 = vmatpush1.msra.mxu0 0.0
    %313 = vmatprep.subr.mxu0 0.0
    %314 = vmatpush1.msra.mxu0 0.0
    %315 = vmatprep.mubr.f32.mxu0 0.0
    %316 = vmatmul.mubr.f32.gmra.mrb[0].mxu0 %v246
    %v317 = vpop.f32.mrb[0].mxu0
    %v318 = vadd.f32 0.0, %v317
    %v319 = vpop.f32.mrb[0].mxu0
    %320 = vmatprep.mubr.f32.mxu0 0.0
    %321 = vmatmul.mubr.f32.gmra.mrb[0].mxu0 %v249
    %v322 = vpop.f32.mrb[0].mxu0
    %v323 = vadd.f32 0.0, %v322
    %v324 = vpop.f32.mrb[0].mxu0
    %325 = vdwg.mxu0
    %vm326 = vcmask 31744
    %v327 = vsel %vm326, %v318, -inf
    %v328 = vrot.slane %v327, 4
    %v329 = vmax.f32 %v327, %v328
    %v330 = vrot.slane %v329, 2
    %v331 = vmax.f32 %v329, %v330
    %v332 = vrot.slane %v331, 1
    %v333 = vmax.f32 %v331, %v332
    %v334 = vsel %vm326, %v323, -inf
    %v335 = vrot.slane %v334, 4
    %v336 = vmax.f32 %v334, %v335
    %v337 = vrot.slane %v336, 2
    %v338 = vmax.f32 %v336, %v337
    %v339 = vrot.slane %v338, 1
    %v340 = vmax.f32 %v338, %v339
    %v341 = vsub.f32 %v318, %v333
    %v342 = vsub.f32 %v323, %v340
    %v343 = vmul.f32 %v341, 1.442695
    %v344 = vpow.pop %v343
    %v345 = vmul.f32 %v342, 1.442695
    %v346 = vpow.pop %v345
    %v347 = vsel %vm326, %v344, 0.0
    %v348 = vrot.slane %v347, 4
    %v349 = vadd.f32 %v347, %v348
    %v350 = vrot.slane %v349, 2
    %v351 = vadd.f32 %v349, %v350
    %v352 = vrot.slane %v351, 1
    %v353 = vadd.f32 %v351, %v352
    %v354 = vsel %vm326, %v346, 0.0
    %v355 = vrot.slane %v354, 4
    %v356 = vadd.f32 %v354, %v355
    %v357 = vrot.slane %v356, 2
    %v358 = vadd.f32 %v356, %v357
    %v359 = vrot.slane %v358, 1
    %v360 = vadd.f32 %v358, %v359
    %v361 = vrcp.pop %v353
    %v362 = vrcp.pop %v360
    %v363 = vmul.f32 %v344, %v361
    %v364 = vmul.f32 %v346, %v362
    %v366 = vsel %vm326, %v363, 0
    %v369 = vsel %vm326, %v364, 0
    %vm371 = vcmask 1043456
    %v373 = vsel %vm371, %v187, 0
    %375 = vmatprep.subr.mxu0 0.0
    %376 = vmatpush1.msra.mxu0 %v373
    %377 = vmatprep.subr.mxu0 0.0
    %378 = vmatpush1.msra.mxu0 0.0
    %379 = vmatprep.subr.mxu0 0.0
    %380 = vmatpush1.msra.mxu0 0.0
    %381 = vmatprep.subr.mxu0 0.0
    %382 = vmatpush1.msra.mxu0 0.0
    %383 = vmatprep.subr.mxu0 0.0
    %384 = vmatpush1.msra.mxu0 0.0
    %385 = vmatprep.subr.mxu0 0.0
    %386 = vmatpush1.msra.mxu0 0.0
    %387 = vmatprep.subr.mxu0 0.0
    %388 = vmatpush1.msra.mxu0 0.0
    %389 = vmatprep.subr.mxu0 0.0
    %390 = vmatpush1.msra.mxu0 0.0
    %391 = vmatprep.subr.mxu0 0.0
    %392 = vmatpush1.msra.mxu0 0.0
    %393 = vmatprep.subr.mxu0 0.0
    %394 = vmatpush1.msra.mxu0 0.0
    %395 = vmatprep.subr.mxu0 0.0
    %396 = vmatpush1.msra.mxu0 0.0
    %397 = vmatprep.subr.mxu0 0.0
    %398 = vmatpush1.msra.mxu0 0.0
    %399 = vmatprep.subr.mxu0 0.0
    %400 = vmatpush1.msra.mxu0 0.0
    %401 = vmatprep.subr.mxu0 0.0
    %402 = vmatpush1.msra.mxu0 0.0
    %403 = vmatprep.subr.mxu0 0.0
    %404 = vmatpush1.msra.mxu0 0.0
    %405 = vmatprep.subr.mxu0 0.0
    %406 = vmatpush1.msra.mxu0 0.0
    %407 = vmatprep.subr.mxu0 0.0
    %408 = vmatpush1.msra.mxu0 0.0
    %409 = vmatprep.subr.mxu0 0.0
    %410 = vmatpush1.msra.mxu0 0.0
    %411 = vmatprep.subr.mxu0 0.0
    %412 = vmatpush1.msra.mxu0 0.0
    %413 = vmatprep.subr.mxu0 0.0
    %414 = vmatpush1.msra.mxu0 0.0
    %415 = vmatprep.subr.mxu0 0.0
    %416 = vmatpush1.msra.mxu0 0.0
    %417 = vmatprep.subr.mxu0 0.0
    %418 = vmatpush1.msra.mxu0 0.0
    %419 = vmatprep.subr.mxu0 0.0
    %420 = vmatpush1.msra.mxu0 0.0
    %421 = vmatprep.subr.mxu0 0.0
    %422 = vmatpush1.msra.mxu0 0.0
    %423 = vmatprep.subr.mxu0 0.0
    %424 = vmatpush1.msra.mxu0 0.0
    %425 = vmatprep.subr.mxu0 0.0
    %426 = vmatpush1.msra.mxu0 0.0
    %427 = vmatprep.subr.mxu0 0.0
    %428 = vmatpush1.msra.mxu0 0.0
    %429 = vmatprep.subr.mxu0 0.0
    %430 = vmatpush1.msra.mxu0 0.0
    %431 = vmatprep.subr.mxu0 0.0
    %432 = vmatpush1.msra.mxu0 0.0
    %433 = vmatprep.subr.mxu0 0.0
    %434 = vmatpush1.msra.mxu0 0.0
    %435 = vmatprep.subr.mxu0 0.0
    %436 = vmatpush1.msra.mxu0 0.0
    %437 = vmatprep.subr.mxu0 0.0
    %438 = vmatpush1.msra.mxu0 0.0
    %439 = vmatprep.mubr.f32.mxu0 0.0
    %440 = vmatmul.mubr.f32.gmra.mrb[0].mxu0 %v366
    %v441 = vpop.f32.mrb[0].mxu0
    %v442 = vadd.f32 0.0, %v441
    %v443 = vpop.f32.mrb[0].mxu0
    %444 = vmatprep.mubr.f32.mxu0 0.0
    %445 = vmatmul.mubr.f32.gmra.mrb[0].mxu0 %v369
    %v446 = vpop.f32.mrb[0].mxu0
    %v447 = vadd.f32 0.0, %v446
    %v448 = vpop.f32.mrb[0].mxu0
    %449 = vdwg.mxu0
    %450 = vrot.lane.b32.xlu0 %v180, 64
    %v451 = vpop.permute.xlu0 %450
    %452 = vrot.lane.b32.xlu0 %v182, 64
    %v453 = vpop.permute.xlu0 %452
    %v456 = vmul.f32 %v442, %v451
    %v457 = vmul.f32 %v447, %v453
    %v458 = vsel %vm59, %v456, 0.0
    %v459 = vrot.slane %v458, 4
    %v460 = vadd.f32 %v458, %v459
    %v461 = vrot.slane %v460, 2
    %v462 = vadd.f32 %v460, %v461
    %v463 = vrot.slane %v462, 1
    %v464 = vadd.f32 %v462, %v463
    %v465 = vsel %vm59, %v457, 0.0
    %v466 = vrot.slane %v465, 4
    %v467 = vadd.f32 %v465, %v466
    %v468 = vrot.slane %v467, 2
    %v469 = vadd.f32 %v467, %v468
    %v470 = vrot.slane %v469, 1
    %v471 = vadd.f32 %v469, %v470
    %v472 = vld [vmem:[%s2 + $0x10] sm:$0xff]
    %v473 = vld [vmem:[%s2 + $0x30] sm:$0xff]
    %v474 = vld [vmem:[%s2 + $0x50] sm:$0xff]
    %v475 = vld [vmem:[%s2 + $0x70] sm:$0xff]
    %v476 = vld [vmem:[%s2 + $0x8] sm:$0xff]
    %v477 = vld [vmem:[%s2 + $0x28] sm:$0xff]
    %v478 = vld [vmem:[%s2 + $0x48] sm:$0xff]
    %v479 = vld [vmem:[%s2 + $0x68] sm:$0xff]
    %v480 = vlaneseq
    %v481 = vshrl.u32 %v480, 7
    %v482 = vsub.s32 0, %v481
    %v483 = vrot.slane %v26, %v482
    %vm486 = vcmask 1041409
    %v487 = vsel %vm486, %v471, %v464
    %v488 = vsel %vm59, %v487, 0
    %490 = vmatprep.subr.mxu0 0.0
    %491 = vmatpush1.msra.mxu0 %v472
    %492 = vmatprep.subr.mxu0 0.0
    %493 = vmatpush1.msra.mxu0 %v473
    %494 = vmatprep.subr.mxu0 0.0
    %495 = vmatpush1.msra.mxu0 %v474
    %496 = vmatprep.subr.mxu0 0.0
    %497 = vmatpush1.msra.mxu0 %v475
    %498 = vmatprep.subr.mxu0 0.0
    %499 = vmatpush1.msra.mxu0 0.0
    %500 = vmatprep.subr.mxu0 0.0
    %501 = vmatpush1.msra.mxu0 0.0
    %502 = vmatprep.subr.mxu0 0.0
    %503 = vmatpush1.msra.mxu0 0.0
    %504 = vmatprep.subr.mxu0 0.0
    %505 = vmatpush1.msra.mxu0 0.0
    %506 = vmatprep.subr.mxu0 0.0
    %507 = vmatpush1.msra.mxu0 0.0
    %508 = vmatprep.subr.mxu0 0.0
    %509 = vmatpush1.msra.mxu0 0.0
    %510 = vmatprep.subr.mxu0 0.0
    %511 = vmatpush1.msra.mxu0 0.0
    %512 = vmatprep.subr.mxu0 0.0
    %513 = vmatpush1.msra.mxu0 0.0
    %514 = vmatprep.subr.mxu0 0.0
    %515 = vmatpush1.msra.mxu0 0.0
    %516 = vmatprep.subr.mxu0 0.0
    %517 = vmatpush1.msra.mxu0 0.0
    %518 = vmatprep.subr.mxu0 0.0
    %519 = vmatpush1.msra.mxu0 0.0
    %520 = vmatprep.subr.mxu0 0.0
    %521 = vmatpush1.msra.mxu0 0.0
    %522 = vmatprep.subr.mxu0 0.0
    %523 = vmatpush1.msra.mxu0 0.0
    %524 = vmatprep.subr.mxu0 0.0
    %525 = vmatpush1.msra.mxu0 0.0
    %526 = vmatprep.subr.mxu0 0.0
    %527 = vmatpush1.msra.mxu0 0.0
    %528 = vmatprep.subr.mxu0 0.0
    %529 = vmatpush1.msra.mxu0 0.0
    %530 = vmatprep.subr.mxu0 0.0
    %531 = vmatpush1.msra.mxu0 0.0
    %532 = vmatprep.subr.mxu0 0.0
    %533 = vmatpush1.msra.mxu0 0.0
    %534 = vmatprep.subr.mxu0 0.0
    %535 = vmatpush1.msra.mxu0 0.0
    %536 = vmatprep.subr.mxu0 0.0
    %537 = vmatpush1.msra.mxu0 0.0
    %538 = vmatprep.subr.mxu0 0.0
    %539 = vmatpush1.msra.mxu0 0.0
    %540 = vmatprep.subr.mxu0 0.0
    %541 = vmatpush1.msra.mxu0 0.0
    %542 = vmatprep.subr.mxu0 0.0
    %543 = vmatpush1.msra.mxu0 0.0
    %544 = vmatprep.subr.mxu0 0.0
    %545 = vmatpush1.msra.mxu0 0.0
    %546 = vmatprep.subr.mxu0 0.0
    %547 = vmatpush1.msra.mxu0 0.0
    %548 = vmatprep.subr.mxu0 0.0
    %549 = vmatpush1.msra.mxu0 0.0
    %550 = vmatprep.subr.mxu0 0.0
    %551 = vmatpush1.msra.mxu0 0.0
    %552 = vmatprep.subr.mxu0 0.0
    %553 = vmatpush1.msra.mxu0 0.0
    %554 = vmatprep.mubr.f32.mxu0 0.0
    %555 = vmatmul.mubr.f32.gmra.mrb[0].mxu0 %v488
    %v556 = vpop.f32.mrb[0].mxu0
    %v557 = vadd.f32 %v483, %v556
    %v558 = vpop.f32.mrb[0].mxu0
    %559 = vdwg.mxu0
    %v560 = vadd.f32 %v21, %v557
    %v561 = vsel %vm33, %v560, 0.0
    %562 = vadd.xlane.f32.xlu0 %v561
    %v563 = vpop.xlane.xlu0 %562
    %v564 = vmul.f32 %v563, %v37
    %v565 = vsub.f32 %v560, %v564
    %v566 = vmul.f32 %v565, %v565
    %v567 = vsel %vm33, %v566, 0.0
    %568 = vadd.xlane.f32.xlu0 %v567
    %v569 = vpop.xlane.xlu0 %568
    %v570 = vmul.f32 %v569, %v37
    %v571 = vadd.f32 %v570, 1e-05
    %v572 = vrsqrt.pop %v571
    %v573 = vmul.f32 %v565, %v572
    %v574 = vlaneseq
    %v575 = vshrl.u32 %v574, 7
    %v576 = vsub.s32 0, %v575
    %v577 = vrot.slane %v29, %v576
    %v578 = vmul.f32 %v573, %v577
    %v579 = vlaneseq
    %v580 = vshrl.u32 %v579, 7
    %v581 = vsub.s32 0, %v580
    %v582 = vrot.slane %v30, %v581
    %v583 = vadd.f32 %v578, %v582
    %v584 = vlaneseq
    %v585 = vshrl.u32 %v584, 7
    %v586 = vsub.s32 0, %v585
    %v587 = vrot.slane %v31, %v586
    %v589 = vsel %vm59, %v583, 0
    %591 = vmatprep.subr.mxu0 0.0
    %592 = vmatpush1.msra.mxu0 %v476
    %593 = vmatprep.subr.mxu0 0.0
    %594 = vmatpush1.msra.mxu0 %v477
    %595 = vmatprep.subr.mxu0 0.0
    %596 = vmatpush1.msra.mxu0 %v478
    %597 = vmatprep.subr.mxu0 0.0
    %598 = vmatpush1.msra.mxu0 %v479
    %599 = vmatprep.subr.mxu0 0.0
    %600 = vmatpush1.msra.mxu0 0.0
    %601 = vmatprep.subr.mxu0 0.0
    %602 = vmatpush1.msra.mxu0 0.0
    %603 = vmatprep.subr.mxu0 0.0
    %604 = vmatpush1.msra.mxu0 0.0
    %605 = vmatprep.subr.mxu0 0.0
    %606 = vmatpush1.msra.mxu0 0.0
    %607 = vmatprep.subr.mxu0 0.0
    %608 = vmatpush1.msra.mxu0 0.0
    %609 = vmatprep.subr.mxu0 0.0
    %610 = vmatpush1.msra.mxu0 0.0
    %611 = vmatprep.subr.mxu0 0.0
    %612 = vmatpush1.msra.mxu0 0.0
    %613 = vmatprep.subr.mxu0 0.0
    %614 = vmatpush1.msra.mxu0 0.0
    %615 = vmatprep.subr.mxu0 0.0
    %616 = vmatpush1.msra.mxu0 0.0
    %617 = vmatprep.subr.mxu0 0.0
    %618 = vmatpush1.msra.mxu0 0.0
    %619 = vmatprep.subr.mxu0 0.0
    %620 = vmatpush1.msra.mxu0 0.0
    %621 = vmatprep.subr.mxu0 0.0
    %622 = vmatpush1.msra.mxu0 0.0
    %623 = vmatprep.subr.mxu0 0.0
    %624 = vmatpush1.msra.mxu0 0.0
    %625 = vmatprep.subr.mxu0 0.0
    %626 = vmatpush1.msra.mxu0 0.0
    %627 = vmatprep.subr.mxu0 0.0
    %628 = vmatpush1.msra.mxu0 0.0
    %629 = vmatprep.subr.mxu0 0.0
    %630 = vmatpush1.msra.mxu0 0.0
    %631 = vmatprep.subr.mxu0 0.0
    %632 = vmatpush1.msra.mxu0 0.0
    %633 = vmatprep.subr.mxu0 0.0
    %634 = vmatpush1.msra.mxu0 0.0
    %635 = vmatprep.subr.mxu0 0.0
    %636 = vmatpush1.msra.mxu0 0.0
    %637 = vmatprep.subr.mxu0 0.0
    %638 = vmatpush1.msra.mxu0 0.0
    %639 = vmatprep.subr.mxu0 0.0
    %640 = vmatpush1.msra.mxu0 0.0
    %641 = vmatprep.subr.mxu0 0.0
    %642 = vmatpush1.msra.mxu0 0.0
    %643 = vmatprep.subr.mxu0 0.0
    %644 = vmatpush1.msra.mxu0 0.0
    %645 = vmatprep.subr.mxu0 0.0
    %646 = vmatpush1.msra.mxu0 0.0
    %647 = vmatprep.subr.mxu0 0.0
    %648 = vmatpush1.msra.mxu0 0.0
    %649 = vmatprep.subr.mxu0 0.0
    %650 = vmatpush1.msra.mxu0 0.0
    %651 = vmatprep.subr.mxu0 0.0
    %652 = vmatpush1.msra.mxu0 0.0
    %653 = vmatprep.subr.mxu0 0.0
    %654 = vmatpush1.msra.mxu0 0.0
    %655 = vmatprep.mubr.f32.mxu0 0.0
    %656 = vmatmul.mubr.f32.gmra.mrb[0].mxu0 %v589
    %v657 = vpop.f32.mrb[0].mxu0
    %v658 = vadd.f32 %v587, %v657
    %v659 = vpop.f32.mrb[0].mxu0
    %660 = vdwg.mxu0
    %v661 = vmax.f32 %v658, 0.0
    %v662 = vld [vmem:[%s3] sm:$0xff]
    %v663 = vld [vmem:[%s3 + $0x8] sm:$0xff]
    %v664 = vld [vmem:[%s3 + $0x10] sm:$0xff]
    %v665 = vld [vmem:[%s3 + $0x18] sm:$0xff]
    %v666 = vld [vmem:[%s3 + $0x20] sm:$0xff]
    %v667 = vld [vmem:[%s3 + $0x28] sm:$0xff]
    %v668 = vld [vmem:[%s3 + $0x30] sm:$0xff]
    %v669 = vld [vmem:[%s3 + $0x38] sm:$0xff]
    %v670 = vld [vmem:[%s3 + $0x40] sm:$0xff]
    %v671 = vld [vmem:[%s3 + $0x48] sm:$0xff]
    %v672 = vld [vmem:[%s3 + $0x50] sm:$0xff]
    %v673 = vld [vmem:[%s3 + $0x58] sm:$0xff]
    %v674 = vld [vmem:[%s3 + $0x60] sm:$0xff]
    %v675 = vld [vmem:[%s3 + $0x68] sm:$0xff]
    %v676 = vld [vmem:[%s3 + $0x70] sm:$0xff]
    %v677 = vld [vmem:[%s3 + $0x78] sm:$0xff]
    %678 = vmatprep.subr.mxu0 0.0
    %679 = vmatpush1.msra.mxu0 %v662
    %680 = vmatprep.subr.mxu0 0.0
    %681 = vmatpush1.msra.mxu0 %v663
    %682 = vmatprep.subr.mxu0 0.0
    %683 = vmatpush1.msra.mxu0 %v664
    %684 = vmatprep.subr.mxu0 0.0
    %685 = vmatpush1.msra.mxu0 %v665
    %686 = vmatprep.subr.mxu0 0.0
    %687 = vmatpush1.msra.mxu0 %v666
    %688 = vmatprep.subr.mxu0 0.0
    %689 = vmatpush1.msra.mxu0 %v667
    %690 = vmatprep.subr.mxu0 0.0
    %691 = vmatpush1.msra.mxu0 %v668
    %692 = vmatprep.subr.mxu0 0.0
    %693 = vmatpush1.msra.mxu0 %v669
    %694 = vmatprep.subr.mxu0 0.0
    %695 = vmatpush1.msra.mxu0 %v670
    %696 = vmatprep.subr.mxu0 0.0
    %697 = vmatpush1.msra.mxu0 %v671
    %698 = vmatprep.subr.mxu0 0.0
    %699 = vmatpush1.msra.mxu0 %v672
    %700 = vmatprep.subr.mxu0 0.0
    %701 = vmatpush1.msra.mxu0 %v673
    %702 = vmatprep.subr.mxu0 0.0
    %703 = vmatpush1.msra.mxu0 %v674
    %704 = vmatprep.subr.mxu0 0.0
    %705 = vmatpush1.msra.mxu0 %v675
    %706 = vmatprep.subr.mxu0 0.0
    %707 = vmatpush1.msra.mxu0 %v676
    %708 = vmatprep.subr.mxu0 0.0
    %709 = vmatpush1.msra.mxu0 %v677
    %710 = vmatprep.subr.mxu0 0.0
    %711 = vmatpush1.msra.mxu0 0.0
    %712 = vmatprep.subr.mxu0 0.0
    %713 = vmatpush1.msra.mxu0 0.0
    %714 = vmatprep.subr.mxu0 0.0
    %715 = vmatpush1.msra.mxu0 0.0
    %716 = vmatprep.subr.mxu0 0.0
    %717 = vmatpush1.msra.mxu0 0.0
    %718 = vmatprep.subr.mxu0 0.0
    %719 = vmatpush1.msra.mxu0 0.0
    %720 = vmatprep.subr.mxu0 0.0
    %721 = vmatpush1.msra.mxu0 0.0
    %722 = vmatprep.subr.mxu0 0.0
    %723 = vmatpush1.msra.mxu0 0.0
    %724 = vmatprep.subr.mxu0 0.0
    %725 = vmatpush1.msra.mxu0 0.0
    %726 = vmatprep.subr.mxu0 0.0
    %727 = vmatpush1.msra.mxu0 0.0
    %728 = vmatprep.subr.mxu0 0.0
    %729 = vmatpush1.msra.mxu0 0.0
    %730 = vmatprep.subr.mxu0 0.0
    %731 = vmatpush1.msra.mxu0 0.0
    %732 = vmatprep.subr.mxu0 0.0
    %733 = vmatpush1.msra.mxu0 0.0
    %734 = vmatprep.subr.mxu0 0.0
    %735 = vmatpush1.msra.mxu0 0.0
    %736 = vmatprep.subr.mxu0 0.0
    %737 = vmatpush1.msra.mxu0 0.0
    %738 = vmatprep.subr.mxu0 0.0
    %739 = vmatpush1.msra.mxu0 0.0
    %740 = vmatprep.subr.mxu0 0.0
    %741 = vmatpush1.msra.mxu0 0.0
    %742 = vmatprep.mubr.f32.mxu0 0.0
    %743 = vmatmul.mubr.f32.gmra.mrb[0].mxu0 %v661
    %v744 = vpop.f32.mrb[0].mxu0
    %v745 = vadd.f32 0.0, %v744
    %v746 = vpop.f32.mrb[0].mxu0
    %747 = vdwg.mxu0
    %v748 = vadd.f32 %v560, %v745
    %v749 = vlaneseq
    %v750 = vshrl.u32 %v749, 7
    %v751 = vsub.s32 0, %v750
    %v752 = vrot.slane %v32, %v751
    %v753 = vadd.f32 %v748, %v752
    %754 = vst.msk [vmem:[#allocation3] sm:$0x3] %vm33, %v753
    // Predicated region
    $region22: #{self_attention_pallas.1} parent=1 // pred_check
      _
    $region23: #{self_attention_pallas.1} parent=1 // pred_check_branch
      %756 = sbr.rel (0) target = $region25
    $region24: #{self_attention_pallas.1} parent=1 // pred_region
      %s758 = ssub.s32 32, 32
      %759 = vsyncadd [#allocation4], %s758
      %s761 = sshll.u32 [#allocation3], 4
      %s762 = int_to_ptr.vmem [resolvable:$true] %s761
      %764 = dma.vmem_to_hbm [thread:$0]  %s762, 32, %s5, [#allocation4]
    $region25: #{self_attention_pallas.1} parent=1 // pred_fallthru
      _
    // Predicated region
    $region26: #{self_attention_pallas.1} parent=1 // pred_check
      _
    $region27: #{self_attention_pallas.1} parent=1 // pred_check_branch
      %766 = sbr.rel (0) target = $region29
    $region28: #{self_attention_pallas.1} parent=1 // pred_region
      %767 = dma.done [#allocation4], 32
    $region29: #{self_attention_pallas.1} parent=1 // pred_fallthru
      _
    %768 = vsyncpa [#allocation4], 1

</llo_original>
